<compile_context>
chip_gen: v6e
topology: v6e:2x2x1
jax: 0.10.0
libtpu: 0.0.40
codegen_flags: <defaults>
</compile_context>

<pallas_src>
import jax
import jax.numpy as jnp
from jax.experimental import pallas as pl
from jax.experimental.pallas import tpu as pltpu


def _scale_add_batchidx_kernel(x_ref, o_ref):
    # Block is (nb, tf): nb batch rows x tf lane-dense features.
    nb = x_ref.shape[0]
    base = pl.program_id(0) * nb  # first batch row covered by this block
    row = base + jax.lax.broadcasted_iota(jnp.int32, x_ref.shape, 0)
    # NOTE: row.astype is exact for f32 batch indices < 2^24; low-precision
    # output dtypes (bf16/fp16) lose exactness above ~256 batch rows.
    o_ref[...] = x_ref[...] * 2 + row.astype(o_ref.dtype)


def _tpu_generation():
    try:
        kind = jax.devices()[0].device_kind.lower()
    except Exception:
        return "unknown"
    if "v5" in kind:
        return "v5"
    if "v6" in kind:
        return "v6"
    if "7" in kind:
        return "v7"
    return "unknown"


def _budget_for_generation(gen):
    """(target bytes per buffer, vmem_limit_bytes, tensorcores per chip)."""
    if gen == "v5":
        # 16 MiB scoped-VMEM default; 4 live buffers (in+out double-buffered)
        # at ~3 MiB each fits with headroom once the limit is raised a bit.
        return 3 * 1024 * 1024, 24 * 1024 * 1024, 1
    if gen == "v6":
        # 128 MiB physical VMEM; raise scoped limit and use bigger steps to
        # amortize the ~0.35 us per-grid-step overhead.
        return 6 * 1024 * 1024, 48 * 1024 * 1024, 1
    if gen == "v7":
        # Only 64 MiB physical VMEM: cap per-buffer tiles at ~6 MiB so
        # 4 live buffers + pipeline headroom stay well under ~40 MiB.
        return 6 * 1024 * 1024, 40 * 1024 * 1024, 2
    return 2 * 1024 * 1024, None, 1


def _choose_tiles(N, F, dtype, target_bytes, num_cores):
    """Pick (rows_per_block, features_per_block) that are VMEM-safe and legal.

    Legality: 2nd-to-last block dim is a multiple of the dtype sublane
    granularity or == N; last block dim is a multiple of 128 or == F.
    """
    itemsize = jnp.dtype(dtype).itemsize
    # Sublane granularity per packed dtype: 8 for f32, 16 for bf16/fp16,
    # 32 for int8/fp8 -- keeps packed vregs full and stores unmasked.
    sub = max(8, 32 // max(1, itemsize))
    target_elems = max(8 * 128, target_bytes // itemsize)
    nbytes = N * F * itemsize

    if N * F <= target_elems:
        # Whole array fits in one block.  On multi-TC chips (v7x), split
        # mid-size arrays into >=2 parallel blocks so both cores stream.
        if num_cores >= 2 and nbytes > 256 * 1024:
            if F >= 2 * 128:
                tf = max(128, ((F // 2) // 128) * 128)
                return N, tf
            if N >= 2 * sub:
                nb = max(sub, ((N // 2) // sub) * sub)
                return nb, F
        # Tiny problems (like the test shape): single grid step, no overhead.
        return N, F

    if F <= target_elems // sub:
        # Keep full (lane-dense) feature rows, tile batch in sublane multiples.
        nb = max(sub, ((target_elems // F) // sub) * sub)
        return min(nb, N), F

    # Feature dim too big for one block: tile it in multiples of 128 lanes.
    nb = sub if N >= sub else N
    tf = max(128, ((target_elems // nb) // 128) * 128)
    return nb, min(tf, F)


def pt_module_forward(x):
    """x: float array of shape (N, ...). Returns x*2 + batch_index."""
    orig_shape = x.shape
    N = orig_shape[0]
    F = 1
    for d in orig_shape[1:]:
        F *= d

    x2 = x.reshape(N, F)  # lane-dense layout for the kernel
    gen = _tpu_generation()
    target_bytes, vmem_limit, num_cores = _budget_for_generation(gen)
    nb, tf = _choose_tiles(N, F, x.dtype, target_bytes, num_cores)
    grid = (pl.cdiv(N, nb), pl.cdiv(F, tf))
    nbytes = N * F * x.dtype.itemsize

    cp_kwargs = dict(dimension_semantics=("parallel", "parallel"))
    if vmem_limit is not None:
        cp_kwargs["vmem_limit_bytes"] = vmem_limit

    out = pl.pallas_call(
        _scale_add_batchidx_kernel,
        out_shape=jax.ShapeDtypeStruct((N, F), x.dtype),
        grid_spec=pl.GridSpec(
            grid=grid,
            in_specs=[pl.BlockSpec((nb, tf), lambda i, j: (i, j))],
            out_specs=pl.BlockSpec((nb, tf), lambda i, j: (i, j)),
        ),
        compiler_params=pltpu.CompilerParams(**cp_kwargs),
        cost_estimate=pl.CostEstimate(
            flops=2 * N * F,
            transcendentals=0,
            bytes_accessed=2 * nbytes,
        ),
    )(x2)
    return out.reshape(orig_shape)


if __name__ == "__main__":
    key = jax.random.PRNGKey(0)
    x = jax.random.normal(key, (2, 4, 16, 16), dtype=jnp.float32)

    out = pt_module_forward(x)
    out = jax.block_until_ready(out)

    # Reference check (plain JAX)
    idx = jnp.arange(x.shape[0], dtype=x.dtype).reshape(-1, 1, 1, 1)
    ref = x * 2 + idx
    assert out.shape == x.shape
    assert jnp.allclose(out, ref, atol=1e-6), "mismatch vs reference"

    print("KERNEL_OK")
</pallas_src>

<mosaic_0001>
module attributes {stable_mosaic.version = 11 : i64} {
  func.func @_scale_add_batchidx_kernel(%arg0: i32, %arg1: i32, %arg2: memref<2x1024xf32, #tpu.memory_space<vmem>>, %arg3: memref<2x1024xf32, #tpu.memory_space<vmem>>) attributes {dimension_semantics = [#tpu.dimension_semantics<parallel>, #tpu.dimension_semantics<parallel>], iteration_bounds = array<i64: 1, 1>, scalar_prefetch = 0 : i64, scratch_operands = 0 : i64, tpu.core_type = #tpu.core_type<tc>, window_params = [{transform_indices = @transform_0, window_bounds = array<i64: 2, 1024>}, {transform_indices = @transform_1, window_bounds = array<i64: 2, 1024>}]} {
    %c2_i32 = arith.constant 2 : i32
    %0 = arith.muli %arg0, %c2_i32 : i32
    %1 = tpu.iota {dimensions = array<i32: 0>} : vector<2x1024xi32>
    %2 = vector.broadcast %0 : i32 to vector<2x1024xi32>
    %3 = arith.addi %2, %1 : vector<2x1024xi32>
    %c0 = arith.constant 0 : index
    %c0_0 = arith.constant 0 : index
    %4 = vector.load %arg2[%c0, %c0_0] : memref<2x1024xf32, #tpu.memory_space<vmem>>, vector<2x1024xf32>
    %cst = arith.constant 2.000000e+00 : f32
    %5 = vector.broadcast %cst : f32 to vector<2x1024xf32>
    %6 = arith.mulf %4, %5 : vector<2x1024xf32>
    %7 = arith.sitofp %3 : vector<2x1024xi32> to vector<2x1024xf32>
    %8 = arith.addf %6, %7 : vector<2x1024xf32>
    %c0_1 = arith.constant 0 : index
    %c0_2 = arith.constant 0 : index
    %9 = vector.load %arg3[%c0_1, %c0_2] : memref<2x1024xf32, #tpu.memory_space<vmem>>, vector<2x1024xf32>
    tpu.vector_store %arg3[%c0_1, %c0_2], %8 {strides = array<i32>} : memref<2x1024xf32, #tpu.memory_space<vmem>>, vector<2x1024xf32>,
    return
  }
  func.func @transform_0(%arg0: i32, %arg1: i32) -> (i32, i32) {
    %c0_i32 = arith.constant 0 : i32
    return %arg0, %arg1 : i32, i32
  }
  func.func @transform_1(%arg0: i32, %arg1: i32) -> (i32, i32) {
    %c0_i32 = arith.constant 0 : i32
    return %arg0, %arg1 : i32, i32
  }
}

</mosaic_0001>

<llo_original>
// kernel: tpu_custom_call.1
$region0: #{tpu_custom_call.1}
  #allocation0 [shape = 'u32[]', space=smem, size = 0x4, offset = 0x4, fixed_abs, tag = 'smem constant byte address 0x4 - core index']
  #allocation1 [shape = 'u32[144,128]{1,0:T(1,128)}', space=vmem, size = 0x12000, scoped, tag = 'internal scratch']
  %s0 = inlined_call_operand.hbm [shape: f32[2,1024], index: 0, kind: input, shape index: {}]
  %s1 = inlined_call_operand.hbm [shape: f32[2,1024], index: 1, kind: output, shape index: {}]
  %s2 = sld [smem:[#allocation0]]
  $region18: #{tpu_custom_call.1} parent=0
    _
  %s4 = ssub.s32 1, %s2
  %s5 = scalar_select 0, %s4, %s2
  $region1: #{tpu_custom_call.1} parent=0
    #allocation2 [shape = 'u8[8192]{0}', space=vmem, size = 0x2000, scoped, tag = 'input window, operand 0, single buffered']
    #allocation3 [shape = 's32[1]{0}', space=sflag, size = 0x4, scoped, tag = 'scoped memory for tpu_custom_call.1']
    #allocation4 [shape = 's32[1]{0}', space=sflag, size = 0x4, scoped, tag = 'scoped memory for tpu_custom_call.1']
    #allocation5 [shape = 'u8[8192]{0}', space=vmem, size = 0x2000, scoped, tag = 'output window, operand 0, single buffered']
    %6 = vsyncpa [#allocation3], 0
    %7 = vsyncpa [#allocation4], 0
    // Predicated region
    $region2: #{tpu_custom_call.1} parent=1 // pred_check
      _
    $region3: #{tpu_custom_call.1} parent=1 // pred_check_branch
      %9 = sbr.rel (0) target = $region5
    $region4: #{tpu_custom_call.1} parent=1 // pred_region
      %s11 = ssub.s32 256, 256
      %12 = vsyncadd [#allocation3], %s11
      %s14 = sshll.u32 [#allocation2], 4
      %s15 = int_to_ptr.vmem [resolvable:$true] %s14
      %17 = dma.hbm_to_vmem [thread:$0]  %s0, 256, %s15, [#allocation3]
    $region5: #{tpu_custom_call.1} parent=1 // pred_fallthru
      _
    // Predicated region
    $region6: #{tpu_custom_call.1} parent=1 // pred_check
      _
    $region7: #{tpu_custom_call.1} parent=1 // pred_check_branch
      %19 = sbr.rel (0) target = $region9
    $region8: #{tpu_custom_call.1} parent=1 // pred_region
      %20 = dma.done [#allocation3], 256
    $region9: #{tpu_custom_call.1} parent=1 // pred_fallthru
      _
    %s21 = smul.u32 0, 2
    %v22 = vlaneseq
    %v23 = vshrl.u32 %v22, 7
    %v24 = vstv %s21
    %v25 = vadd.s32 %v24, %v23
    %v26 = vld [vmem:[#allocation2] sm:$0xff]
    %v27 = vld [vmem:[#allocation2 + $0x8] sm:$0xff]
    %v28 = vmul.f32 %v26, 2.0
    %v29 = vmul.f32 %v27, 2.0
    %v30 = vcvt.s32.f32 %v25
    %v33 = vunpack.c.l.s4 269488144
    %v34 = vunpack.c.0.s8 %v33
    %v35 = vlaneseq
    %v36 = vshrl.u32 %v35, 7
    %v37 = vsub.s32 %v34, %v36
    %v38 = vrot.slane %v30, %v37
    %v40 = vadd.f32 %v28, %v38
    %v41 = vadd.f32 %v29, %v38
    %42 = vst [vmem:[#allocation5] sm:$0xff] %v40
    %43 = vst [vmem:[#allocation5 + $0x8] sm:$0xff] %v41
    // Predicated region
    $region10: #{tpu_custom_call.1} parent=1 // pred_check
      _
    $region11: #{tpu_custom_call.1} parent=1 // pred_check_branch
      %45 = sbr.rel (0) target = $region13
    $region12: #{tpu_custom_call.1} parent=1 // pred_region
      %s47 = ssub.s32 256, 256
      %48 = vsyncadd [#allocation4], %s47
      %s50 = sshll.u32 [#allocation5], 4
      %s51 = int_to_ptr.vmem [resolvable:$true] %s50
      %53 = dma.vmem_to_hbm [thread:$0]  %s51, 256, %s1, [#allocation4]
    $region13: #{tpu_custom_call.1} parent=1 // pred_fallthru
      _
    // Predicated region
    $region14: #{tpu_custom_call.1} parent=1 // pred_check
      _
    $region15: #{tpu_custom_call.1} parent=1 // pred_check_branch
      %55 = sbr.rel (0) target = $region17
    $region16: #{tpu_custom_call.1} parent=1 // pred_region
      %56 = dma.done [#allocation4], 256
    $region17: #{tpu_custom_call.1} parent=1 // pred_fallthru
      _
    %57 = vsyncpa [#allocation3], 1
    %58 = vsyncpa [#allocation4], 1

</llo_original>
